<compile_context>
chip_gen: v6e
topology: v6e:2x2x1
jax: 0.10.0
libtpu: 0.0.40
codegen_flags: <defaults>
</compile_context>

<pallas_src>
import jax
import jax.numpy as jnp
from jax.experimental import pallas as pl
from jax.experimental.pallas import tpu as pltpu

EPS = 1e-5  # PyTorch nn.LayerNorm default


def _round_up(a, b):
    return ((a + b - 1) // b) * b


def _fused_layernorm(h, gamma, beta, inv_n):
    # One pass: sum and sum-of-squares are independent XLU reductions (not
    # serialized through (h - mean)).
    s = jnp.sum(h, axis=-1, keepdims=True)
    ss = jnp.sum(h * h, axis=-1, keepdims=True)
    mean = s * inv_n
    var = ss * inv_n - mean * mean
    return (h - mean) * jax.lax.rsqrt(var + EPS) * gamma + beta


def _small_k_matmul(x, w):
    """x @ w for a tiny contraction dim (K = x.shape[-1] = 4) on the VPU.

    Each column of x (static lane slice) is broadcast-FMA'd against the matching
    row of w.  K=4 would waste >95% of an MXU systolic pass, so keep it off the MXU.
    """
    _, kdim = x.shape
    out = None
    for k in range(kdim):                          # static loop, K is tiny
        term = x[:, k:k + 1] * w[k:k + 1, :]       # (m,1)*(1,n) -> (m,n)
        out = term if out is None else out + term
    return out


def strand_encoder_kernel(x_ref,
                          w0_ref, b0_ref, g0_ref, bt0_ref,
                          w1a_ref, w1b_ref, b1_ref, g1_ref, bt1_ref,
                          w2_ref, b2_ref,
                          wh_ref, bh_ref,
                          out_ref):
    f32 = jnp.float32
    x = x_ref[...].astype(f32)                    # (tm, IN); elementwise math in f32
    inv_h = 1.0 / w0_ref.shape[1]
    mxu_dt = w1a_ref.dtype                        # bf16 (default) or f32

    # FCBlock 0: Linear(IN->HID) -> LayerNorm -> ReLU (no residual: IN != HID)
    h = _small_k_matmul(x, w0_ref[...]) + b0_ref[...]
    h = _fused_layernorm(h, g0_ref[...], bt0_ref[...], inv_h)
    h = jnp.maximum(h, 0.0)

    # FCBlock 1: Linear over cat(h, x) -> LN -> ReLU, as a split matmul:
    # h @ W1[:HID] on the MXU  +  x @ W1[HID:] on the VPU (no lane concat needed).
    h1 = jnp.dot(h.astype(mxu_dt), w1a_ref[...], preferred_element_type=f32)
    h1 = h1 + _small_k_matmul(x, w1b_ref[...]) + b1_ref[...]
    h1 = _fused_layernorm(h1, g1_ref[...], bt1_ref[...], inv_h)
    h1 = jnp.maximum(h1, 0.0)

    # FCBlock 2 (last MLP layer): Linear(HID->HID), residual (+h1), ReLU, no LN
    h2 = jnp.dot(h1.astype(mxu_dt), w2_ref[...], preferred_element_type=f32) + b2_ref[...]
    h2 = jnp.maximum(h2 + h1, 0.0)

    # Fused heads: one lane-dense matmul -> [mu | log_sigma | zero pad] (tm, 128)
    out = jnp.dot(h2.astype(mxu_dt), wh_ref[...], preferred_element_type=f32) + bh_ref[...]
    out_ref[...] = out.astype(out_ref.dtype)


def strand_encoder_pallas(x2d, p, *, tm=1024, compute_dtype=jnp.bfloat16):
    """x2d: (M, in_features) f32.  Returns (mu, log_sigma), each (M, out_features)
    in `compute_dtype`.  bf16 is the recommended perf config on v6e/v7x (halved
    HBM traffic + bf16 MXU passes); pass jnp.float32 for full precision."""
    M, IN = x2d.shape
    HID = p["w0"].shape[1]
    OUT = p["wmu"].shape[1]
    OUT2 = 2 * OUT
    OUT_PAD = _round_up(OUT2, 128)                # lane-dense output slab

    cd = jnp.dtype(compute_dtype)
    f32 = jnp.float32

    # Row tiling: large tiles, clamped for small M, rows zero-padded to a multiple.
    tm_eff = min(tm, _round_up(M, 16))            # 16: safe for bf16 sublane packing
    M_pad = _round_up(M, tm_eff)
    x_p = x2d if M_pad == M else jnp.pad(x2d, ((0, M_pad - M), (0, 0)))
    x_p = x_p.astype(cd)

    # Head fusion + lane padding (done once, outside the kernel).
    w_head = jnp.concatenate([p["wmu"], p["wls"]], axis=1)           # (HID, 2*OUT)
    w_head = jnp.pad(w_head, ((0, 0), (0, OUT_PAD - OUT2))).astype(cd)
    b_head = jnp.concatenate([p["bmu"], p["bls"]], axis=1)
    b_head = jnp.pad(b_head, ((0, 0), (0, OUT_PAD - OUT2))).astype(f32)

    weights = [
        # FCBlock 0 (K=4 weight stays f32: used on the VPU, not the MXU)
        p["w0"].astype(f32), p["b0"].astype(f32), p["g0"].astype(f32), p["bt0"].astype(f32),
        # FCBlock 1 (split weight: MXU part in compute dtype, K=4 part in f32)
        p["w1a"].astype(cd), p["w1b"].astype(f32),
        p["b1"].astype(f32), p["g1"].astype(f32), p["bt1"].astype(f32),
        # FCBlock 2
        p["w2"].astype(cd), p["b2"].astype(f32),
        # fused heads
        w_head, b_head,
    ]

    # All weights are 2-D and VMEM-resident (constant block index -> loaded once).
    full_spec = lambda arr: pl.BlockSpec(arr.shape, lambda i: (0, 0))
    in_specs = [pl.BlockSpec((tm_eff, IN), lambda i: (i, 0))] + [full_spec(w) for w in weights]
    out_spec = pl.BlockSpec((tm_eff, OUT_PAD), lambda i: (i, 0))

    grid_spec = pltpu.PrefetchScalarGridSpec(
        num_scalar_prefetch=0,
        grid=(M_pad // tm_eff,),
        in_specs=in_specs,
        out_specs=out_spec,
    )

    out = pl.pallas_call(
        strand_encoder_kernel,
        out_shape=jax.ShapeDtypeStruct((M_pad, OUT_PAD), cd),
        grid_spec=grid_spec,
        compiler_params=pltpu.CompilerParams(
            dimension_semantics=("parallel",)),   # megacore sharding on v7x
    )(x_p, *weights)

    mu = out[:M, :OUT]
    log_sigma = out[:M, OUT:OUT2]
    return mu, log_sigma


def ref_forward(x2d, p):
    """Pure-JAX reference mirroring the PyTorch StrandEncoder forward.

    Layer 1's Linear over cat(h, x) is a single PyTorch Linear whose weight is
    stored split as [w1a (HID rows); w1b (IN rows)].  Tiny-K products are computed
    exactly in f32 so the reference matches the kernel's VPU formulation."""
    def ln(h, g, b):
        m = h.mean(-1, keepdims=True)
        v = jnp.mean(jnp.square(h - m), -1, keepdims=True)
        return (h - m) / jnp.sqrt(v + EPS) * g + b

    def exact_small(x, w):                         # exact f32 x @ w for tiny K
        return jnp.sum(x[:, :, None] * w[None, :, :], axis=1)

    h = jnp.maximum(ln(exact_small(x2d, p["w0"]) + p["b0"], p["g0"], p["bt0"]), 0.0)
    h1 = jnp.maximum(ln(h @ p["w1a"] + exact_small(x2d, p["w1b"]) + p["b1"],
                        p["g1"], p["bt1"]), 0.0)
    h2 = jnp.maximum(h1 @ p["w2"] + p["b2"] + h1, 0.0)     # residual, no LN, ReLU
    return h2 @ p["wmu"] + p["bmu"], h2 @ p["wls"] + p["bls"]


def init_params(key, in_features, hidden_features, out_features):
    ks = jax.random.split(key, 16)
    n = lambda k, shape, s=0.1: (s * jax.random.normal(k, shape)).astype(jnp.float32)
    return {
        # FCBlock 0
        "w0": n(ks[0], (in_features, hidden_features)),
        "b0": n(ks[1], (1, hidden_features)),
        "g0": 1.0 + n(ks[2], (1, hidden_features)),
        "bt0": n(ks[3], (1, hidden_features), 0.01),
        # FCBlock 1 (input = cat(h, x)): split weight [hid rows ; in rows]
        "w1a": n(ks[4], (hidden_features, hidden_features)),
        "w1b": n(ks[5], (in_features, hidden_features)),
        "b1": n(ks[6], (1, hidden_features)),
        "g1": 1.0 + n(ks[7], (1, hidden_features)),
        "bt1": n(ks[8], (1, hidden_features), 0.01),
        # FCBlock 2 (last MLP layer, no LN, residual)
        "w2": n(ks[9], (hidden_features, hidden_features)),
        "b2": n(ks[10], (1, hidden_features)),
        # heads
        "wmu": n(ks[11], (hidden_features, out_features)),
        "bmu": n(ks[12], (1, out_features)),
        "wls": n(ks[13], (hidden_features, out_features)),
        "bls": n(ks[14], (1, out_features)),
    }


if __name__ == "__main__":
    # StrandEncoder(in_features=4, out_features=16, hidden_layers=2, hidden_features=32)
    B, S, IN, HID, OUT = 2, 8, 4, 32, 16

    key = jax.random.PRNGKey(0)
    kx, kp = jax.random.split(key)
    x = jax.random.normal(kx, (B, S, IN), dtype=jnp.float32)
    params = init_params(kp, IN, HID, OUT)
    x2d = x.reshape(B * S, IN)

    mu_r, ls_r = ref_forward(x2d, params)

    # f32 compute path — tolerance covers the TPU's default MXU precision (bf16
    # passes) propagated through two LayerNorms.
    mu32, ls32 = strand_encoder_pallas(x2d, params, compute_dtype=jnp.float32)
    jax.block_until_ready((mu32, ls32))
    assert mu32.shape == (B * S, OUT) and ls32.shape == (B * S, OUT)
    assert jnp.allclose(mu32, mu_r, atol=2e-2, rtol=2e-2)
    assert jnp.allclose(ls32, ls_r, atol=2e-2, rtol=2e-2)

    # bf16 compute path (recommended perf config on v6e/v7x) — bf16-level tolerance.
    mubf, lsbf = strand_encoder_pallas(x2d, params, compute_dtype=jnp.bfloat16)
    jax.block_until_ready((mubf, lsbf))
    assert jnp.allclose(mubf.astype(jnp.float32), mu_r, atol=1.5e-1, rtol=1.5e-1)
    assert jnp.allclose(lsbf.astype(jnp.float32), ls_r, atol=1.5e-1, rtol=1.5e-1)

    mu = mu32.reshape(B, S, OUT)
    log_sigma = ls32.reshape(B, S, OUT)
    jax.block_until_ready((mu, log_sigma))

    print("KERNEL_OK")
</pallas_src>

<mosaic_0001>
module attributes {stable_mosaic.version = 11 : i64} {
  func.func @strand_encoder_kernel(%arg0: i32, %arg1: memref<16x4xf32, #tpu.memory_space<vmem>>, %arg2: memref<4x32xf32, #tpu.memory_space<vmem>>, %arg3: memref<1x32xf32, #tpu.memory_space<vmem>>, %arg4: memref<1x32xf32, #tpu.memory_space<vmem>>, %arg5: memref<1x32xf32, #tpu.memory_space<vmem>>, %arg6: memref<32x32xf32, #tpu.memory_space<vmem>>, %arg7: memref<4x32xf32, #tpu.memory_space<vmem>>, %arg8: memref<1x32xf32, #tpu.memory_space<vmem>>, %arg9: memref<1x32xf32, #tpu.memory_space<vmem>>, %arg10: memref<1x32xf32, #tpu.memory_space<vmem>>, %arg11: memref<32x32xf32, #tpu.memory_space<vmem>>, %arg12: memref<1x32xf32, #tpu.memory_space<vmem>>, %arg13: memref<32x128xf32, #tpu.memory_space<vmem>>, %arg14: memref<1x128xf32, #tpu.memory_space<vmem>>, %arg15: memref<16x128xf32, #tpu.memory_space<vmem>>) attributes {dimension_semantics = [#tpu.dimension_semantics<parallel>], iteration_bounds = array<i64: 1>, scalar_prefetch = 0 : i64, scratch_operands = 0 : i64, tpu.core_type = #tpu.core_type<tc>, window_params = [{transform_indices = @transform_0, window_bounds = array<i64: 16, 4>}, {pipeline_mode = #tpu.pipeline_mode<synchronous>, transform_indices = @transform_1, window_bounds = array<i64: 4, 32>}, {pipeline_mode = #tpu.pipeline_mode<synchronous>, transform_indices = @transform_2, window_bounds = array<i64: 1, 32>}, {pipeline_mode = #tpu.pipeline_mode<synchronous>, transform_indices = @transform_3, window_bounds = array<i64: 1, 32>}, {pipeline_mode = #tpu.pipeline_mode<synchronous>, transform_indices = @transform_4, window_bounds = array<i64: 1, 32>}, {pipeline_mode = #tpu.pipeline_mode<synchronous>, transform_indices = @transform_5, window_bounds = array<i64: 32, 32>}, {pipeline_mode = #tpu.pipeline_mode<synchronous>, transform_indices = @transform_6, window_bounds = array<i64: 4, 32>}, {pipeline_mode = #tpu.pipeline_mode<synchronous>, transform_indices = @transform_7, window_bounds = array<i64: 1, 32>}, {pipeline_mode = #tpu.pipeline_mode<synchronous>, transform_indices = @transform_8, window_bounds = array<i64: 1, 32>}, {pipeline_mode = #tpu.pipeline_mode<synchronous>, transform_indices = @transform_9, window_bounds = array<i64: 1, 32>}, {pipeline_mode = #tpu.pipeline_mode<synchronous>, transform_indices = @transform_10, window_bounds = array<i64: 32, 32>}, {pipeline_mode = #tpu.pipeline_mode<synchronous>, transform_indices = @transform_11, window_bounds = array<i64: 1, 32>}, {pipeline_mode = #tpu.pipeline_mode<synchronous>, transform_indices = @transform_12, window_bounds = array<i64: 32, 128>}, {pipeline_mode = #tpu.pipeline_mode<synchronous>, transform_indices = @transform_13, window_bounds = array<i64: 1, 128>}, {transform_indices = @transform_14, window_bounds = array<i64: 16, 128>}]} {
    %c0 = arith.constant 0 : index
    %c0_0 = arith.constant 0 : index
    %0 = vector.load %arg1[%c0, %c0_0] : memref<16x4xf32, #tpu.memory_space<vmem>>, vector<16x4xf32>
    %c0_1 = arith.constant 0 : index
    %c0_2 = arith.constant 0 : index
    %1 = vector.load %arg2[%c0_1, %c0_2] : memref<4x32xf32, #tpu.memory_space<vmem>>, vector<4x32xf32>
    %2 = vector.extract_strided_slice %0 {offsets = [0, 0], sizes = [16, 1], strides = [1, 1]} : vector<16x4xf32> to vector<16x1xf32>
    %3 = vector.extract_strided_slice %1 {offsets = [0, 0], sizes = [1, 32], strides = [1, 1]} : vector<4x32xf32> to vector<1x32xf32>
    %4 = vector.broadcast %2 : vector<16x1xf32> to vector<16x32xf32>
    %5 = vector.broadcast %3 : vector<1x32xf32> to vector<16x32xf32>
    %6 = arith.mulf %4, %5 : vector<16x32xf32>
    %7 = vector.extract_strided_slice %0 {offsets = [0, 1], sizes = [16, 1], strides = [1, 1]} : vector<16x4xf32> to vector<16x1xf32>
    %8 = vector.extract_strided_slice %1 {offsets = [1, 0], sizes = [1, 32], strides = [1, 1]} : vector<4x32xf32> to vector<1x32xf32>
    %9 = vector.broadcast %7 : vector<16x1xf32> to vector<16x32xf32>
    %10 = vector.broadcast %8 : vector<1x32xf32> to vector<16x32xf32>
    %11 = arith.mulf %9, %10 : vector<16x32xf32>
    %12 = arith.addf %6, %11 : vector<16x32xf32>
    %13 = vector.extract_strided_slice %0 {offsets = [0, 2], sizes = [16, 1], strides = [1, 1]} : vector<16x4xf32> to vector<16x1xf32>
    %14 = vector.extract_strided_slice %1 {offsets = [2, 0], sizes = [1, 32], strides = [1, 1]} : vector<4x32xf32> to vector<1x32xf32>
    %15 = vector.broadcast %13 : vector<16x1xf32> to vector<16x32xf32>
    %16 = vector.broadcast %14 : vector<1x32xf32> to vector<16x32xf32>
    %17 = arith.mulf %15, %16 : vector<16x32xf32>
    %18 = arith.addf %12, %17 : vector<16x32xf32>
    %19 = vector.extract_strided_slice %0 {offsets = [0, 3], sizes = [16, 1], strides = [1, 1]} : vector<16x4xf32> to vector<16x1xf32>
    %20 = vector.extract_strided_slice %1 {offsets = [3, 0], sizes = [1, 32], strides = [1, 1]} : vector<4x32xf32> to vector<1x32xf32>
    %21 = vector.broadcast %19 : vector<16x1xf32> to vector<16x32xf32>
    %22 = vector.broadcast %20 : vector<1x32xf32> to vector<16x32xf32>
    %23 = arith.mulf %21, %22 : vector<16x32xf32>
    %24 = arith.addf %18, %23 : vector<16x32xf32>
    %c0_3 = arith.constant 0 : index
    %c0_4 = arith.constant 0 : index
    %25 = vector.load %arg3[%c0_3, %c0_4] : memref<1x32xf32, #tpu.memory_space<vmem>>, vector<1x32xf32>
    %26 = vector.broadcast %25 : vector<1x32xf32> to vector<16x32xf32>
    %27 = arith.addf %24, %26 : vector<16x32xf32>
    %c0_5 = arith.constant 0 : index
    %c0_6 = arith.constant 0 : index
    %28 = vector.load %arg4[%c0_5, %c0_6] : memref<1x32xf32, #tpu.memory_space<vmem>>, vector<1x32xf32>
    %c0_7 = arith.constant 0 : index
    %c0_8 = arith.constant 0 : index
    %29 = vector.load %arg5[%c0_7, %c0_8] : memref<1x32xf32, #tpu.memory_space<vmem>>, vector<1x32xf32>
    %cst = arith.constant dense<0.000000e+00> : vector<16xf32>
    %30 = vector.multi_reduction <add>, %27, %cst [1] : vector<16x32xf32> to vector<16xf32>
    %31 = vector.shape_cast %30 : vector<16xf32> to vector<16x1xf32>
    %32 = arith.mulf %27, %27 : vector<16x32xf32>
    %cst_9 = arith.constant dense<0.000000e+00> : vector<16xf32>
    %33 = vector.multi_reduction <add>, %32, %cst_9 [1] : vector<16x32xf32> to vector<16xf32>
    %34 = vector.shape_cast %33 : vector<16xf32> to vector<16x1xf32>
    %cst_10 = arith.constant 3.125000e-02 : f32
    %35 = vector.broadcast %cst_10 : f32 to vector<16x1xf32>
    %36 = arith.mulf %31, %35 : vector<16x1xf32>
    %cst_11 = arith.constant 3.125000e-02 : f32
    %37 = vector.broadcast %cst_11 : f32 to vector<16x1xf32>
    %38 = arith.mulf %34, %37 : vector<16x1xf32>
    %39 = arith.mulf %36, %36 : vector<16x1xf32>
    %40 = arith.subf %38, %39 : vector<16x1xf32>
    %41 = vector.broadcast %36 : vector<16x1xf32> to vector<16x32xf32>
    %42 = arith.subf %27, %41 : vector<16x32xf32>
    %cst_12 = arith.constant 9.99999974E-6 : f32
    %43 = vector.broadcast %cst_12 : f32 to vector<16x1xf32>
    %44 = arith.addf %40, %43 : vector<16x1xf32>
    %45 = math.rsqrt %44 : vector<16x1xf32>
    %46 = vector.broadcast %45 : vector<16x1xf32> to vector<16x32xf32>
    %47 = arith.mulf %42, %46 : vector<16x32xf32>
    %48 = vector.broadcast %28 : vector<1x32xf32> to vector<16x32xf32>
    %49 = arith.mulf %47, %48 : vector<16x32xf32>
    %50 = vector.broadcast %29 : vector<1x32xf32> to vector<16x32xf32>
    %51 = arith.addf %49, %50 : vector<16x32xf32>
    %cst_13 = arith.constant 0.000000e+00 : f32
    %52 = vector.broadcast %cst_13 : f32 to vector<16x32xf32>
    %53 = arith.maximumf %51, %52 : vector<16x32xf32>
    %c0_14 = arith.constant 0 : index
    %c0_15 = arith.constant 0 : index
    %54 = vector.load %arg6[%c0_14, %c0_15] : memref<32x32xf32, #tpu.memory_space<vmem>>, vector<32x32xf32>
    %cst_16 = arith.constant dense<0.000000e+00> : vector<16x32xf32>
    %55 = tpu.matmul %53, %54, %cst_16 {dimension_numbers = #tpu.dot_dimension_numbers<[1], [0], [0], [1], [0, 0, 1, 1], [], []>} : vector<16x32xf32>, vector<32x32xf32>, vector<16x32xf32> -> vector<16x32xf32>
    %c0_17 = arith.constant 0 : index
    %c0_18 = arith.constant 0 : index
    %56 = vector.load %arg7[%c0_17, %c0_18] : memref<4x32xf32, #tpu.memory_space<vmem>>, vector<4x32xf32>
    %57 = vector.extract_strided_slice %0 {offsets = [0, 0], sizes = [16, 1], strides = [1, 1]} : vector<16x4xf32> to vector<16x1xf32>
    %58 = vector.extract_strided_slice %56 {offsets = [0, 0], sizes = [1, 32], strides = [1, 1]} : vector<4x32xf32> to vector<1x32xf32>
    %59 = vector.broadcast %57 : vector<16x1xf32> to vector<16x32xf32>
    %60 = vector.broadcast %58 : vector<1x32xf32> to vector<16x32xf32>
    %61 = arith.mulf %59, %60 : vector<16x32xf32>
    %62 = vector.extract_strided_slice %0 {offsets = [0, 1], sizes = [16, 1], strides = [1, 1]} : vector<16x4xf32> to vector<16x1xf32>
    %63 = vector.extract_strided_slice %56 {offsets = [1, 0], sizes = [1, 32], strides = [1, 1]} : vector<4x32xf32> to vector<1x32xf32>
    %64 = vector.broadcast %62 : vector<16x1xf32> to vector<16x32xf32>
    %65 = vector.broadcast %63 : vector<1x32xf32> to vector<16x32xf32>
    %66 = arith.mulf %64, %65 : vector<16x32xf32>
    %67 = arith.addf %61, %66 : vector<16x32xf32>
    %68 = vector.extract_strided_slice %0 {offsets = [0, 2], sizes = [16, 1], strides = [1, 1]} : vector<16x4xf32> to vector<16x1xf32>
    %69 = vector.extract_strided_slice %56 {offsets = [2, 0], sizes = [1, 32], strides = [1, 1]} : vector<4x32xf32> to vector<1x32xf32>
    %70 = vector.broadcast %68 : vector<16x1xf32> to vector<16x32xf32>
    %71 = vector.broadcast %69 : vector<1x32xf32> to vector<16x32xf32>
    %72 = arith.mulf %70, %71 : vector<16x32xf32>
    %73 = arith.addf %67, %72 : vector<16x32xf32>
    %74 = vector.extract_strided_slice %0 {offsets = [0, 3], sizes = [16, 1], strides = [1, 1]} : vector<16x4xf32> to vector<16x1xf32>
    %75 = vector.extract_strided_slice %56 {offsets = [3, 0], sizes = [1, 32], strides = [1, 1]} : vector<4x32xf32> to vector<1x32xf32>
    %76 = vector.broadcast %74 : vector<16x1xf32> to vector<16x32xf32>
    %77 = vector.broadcast %75 : vector<1x32xf32> to vector<16x32xf32>
    %78 = arith.mulf %76, %77 : vector<16x32xf32>
    %79 = arith.addf %73, %78 : vector<16x32xf32>
    %80 = arith.addf %55, %79 : vector<16x32xf32>
    %c0_19 = arith.constant 0 : index
    %c0_20 = arith.constant 0 : index
    %81 = vector.load %arg8[%c0_19, %c0_20] : memref<1x32xf32, #tpu.memory_space<vmem>>, vector<1x32xf32>
    %82 = vector.broadcast %81 : vector<1x32xf32> to vector<16x32xf32>
    %83 = arith.addf %80, %82 : vector<16x32xf32>
    %c0_21 = arith.constant 0 : index
    %c0_22 = arith.constant 0 : index
    %84 = vector.load %arg9[%c0_21, %c0_22] : memref<1x32xf32, #tpu.memory_space<vmem>>, vector<1x32xf32>
    %c0_23 = arith.constant 0 : index
    %c0_24 = arith.constant 0 : index
    %85 = vector.load %arg10[%c0_23, %c0_24] : memref<1x32xf32, #tpu.memory_space<vmem>>, vector<1x32xf32>
    %cst_25 = arith.constant dense<0.000000e+00> : vector<16xf32>
    %86 = vector.multi_reduction <add>, %83, %cst_25 [1] : vector<16x32xf32> to vector<16xf32>
    %87 = vector.shape_cast %86 : vector<16xf32> to vector<16x1xf32>
    %88 = arith.mulf %83, %83 : vector<16x32xf32>
    %cst_26 = arith.constant dense<0.000000e+00> : vector<16xf32>
    %89 = vector.multi_reduction <add>, %88, %cst_26 [1] : vector<16x32xf32> to vector<16xf32>
    %90 = vector.shape_cast %89 : vector<16xf32> to vector<16x1xf32>
    %cst_27 = arith.constant 3.125000e-02 : f32
    %91 = vector.broadcast %cst_27 : f32 to vector<16x1xf32>
    %92 = arith.mulf %87, %91 : vector<16x1xf32>
    %cst_28 = arith.constant 3.125000e-02 : f32
    %93 = vector.broadcast %cst_28 : f32 to vector<16x1xf32>
    %94 = arith.mulf %90, %93 : vector<16x1xf32>
    %95 = arith.mulf %92, %92 : vector<16x1xf32>
    %96 = arith.subf %94, %95 : vector<16x1xf32>
    %97 = vector.broadcast %92 : vector<16x1xf32> to vector<16x32xf32>
    %98 = arith.subf %83, %97 : vector<16x32xf32>
    %cst_29 = arith.constant 9.99999974E-6 : f32
    %99 = vector.broadcast %cst_29 : f32 to vector<16x1xf32>
    %100 = arith.addf %96, %99 : vector<16x1xf32>
    %101 = math.rsqrt %100 : vector<16x1xf32>
    %102 = vector.broadcast %101 : vector<16x1xf32> to vector<16x32xf32>
    %103 = arith.mulf %98, %102 : vector<16x32xf32>
    %104 = vector.broadcast %84 : vector<1x32xf32> to vector<16x32xf32>
    %105 = arith.mulf %103, %104 : vector<16x32xf32>
    %106 = vector.broadcast %85 : vector<1x32xf32> to vector<16x32xf32>
    %107 = arith.addf %105, %106 : vector<16x32xf32>
    %cst_30 = arith.constant 0.000000e+00 : f32
    %108 = vector.broadcast %cst_30 : f32 to vector<16x32xf32>
    %109 = arith.maximumf %107, %108 : vector<16x32xf32>
    %c0_31 = arith.constant 0 : index
    %c0_32 = arith.constant 0 : index
    %110 = vector.load %arg11[%c0_31, %c0_32] : memref<32x32xf32, #tpu.memory_space<vmem>>, vector<32x32xf32>
    %cst_33 = arith.constant dense<0.000000e+00> : vector<16x32xf32>
    %111 = tpu.matmul %109, %110, %cst_33 {dimension_numbers = #tpu.dot_dimension_numbers<[1], [0], [0], [1], [0, 0, 1, 1], [], []>} : vector<16x32xf32>, vector<32x32xf32>, vector<16x32xf32> -> vector<16x32xf32>
    %c0_34 = arith.constant 0 : index
    %c0_35 = arith.constant 0 : index
    %112 = vector.load %arg12[%c0_34, %c0_35] : memref<1x32xf32, #tpu.memory_space<vmem>>, vector<1x32xf32>
    %113 = vector.broadcast %112 : vector<1x32xf32> to vector<16x32xf32>
    %114 = arith.addf %111, %113 : vector<16x32xf32>
    %115 = arith.addf %114, %109 : vector<16x32xf32>
    %cst_36 = arith.constant 0.000000e+00 : f32
    %116 = vector.broadcast %cst_36 : f32 to vector<16x32xf32>
    %117 = arith.maximumf %115, %116 : vector<16x32xf32>
    %c0_37 = arith.constant 0 : index
    %c0_38 = arith.constant 0 : index
    %118 = vector.load %arg13[%c0_37, %c0_38] : memref<32x128xf32, #tpu.memory_space<vmem>>, vector<32x128xf32>
    %cst_39 = arith.constant dense<0.000000e+00> : vector<16x128xf32>
    %119 = tpu.matmul %117, %118, %cst_39 {dimension_numbers = #tpu.dot_dimension_numbers<[1], [0], [0], [1], [0, 0, 1, 1], [], []>} : vector<16x32xf32>, vector<32x128xf32>, vector<16x128xf32> -> vector<16x128xf32>
    %c0_40 = arith.constant 0 : index
    %c0_41 = arith.constant 0 : index
    %120 = vector.load %arg14[%c0_40, %c0_41] : memref<1x128xf32, #tpu.memory_space<vmem>>, vector<1x128xf32>
    %121 = vector.broadcast %120 : vector<1x128xf32> to vector<16x128xf32>
    %122 = arith.addf %119, %121 : vector<16x128xf32>
    %c0_42 = arith.constant 0 : index
    %c0_43 = arith.constant 0 : index
    %123 = vector.load %arg15[%c0_42, %c0_43] : memref<16x128xf32, #tpu.memory_space<vmem>>, vector<16x128xf32>
    tpu.vector_store %arg15[%c0_42, %c0_43], %122 {strides = array<i32>} : memref<16x128xf32, #tpu.memory_space<vmem>>, vector<16x128xf32>,
    return
  }
  func.func @transform_0(%arg0: i32) -> (i32, i32) {
    %c0_i32 = arith.constant 0 : i32
    %c0_i32_0 = arith.constant 0 : i32
    return %arg0, %c0_i32 : i32, i32
  }
  func.func @transform_1(%arg0: i32) -> (i32, i32) {
    %c0_i32 = arith.constant 0 : i32
    %c0_i32_0 = arith.constant 0 : i32
    %c0_i32_1 = arith.constant 0 : i32
    return %c0_i32, %c0_i32_0 : i32, i32
  }
  func.func @transform_2(%arg0: i32) -> (i32, i32) {
    %c0_i32 = arith.constant 0 : i32
    %c0_i32_0 = arith.constant 0 : i32
    %c0_i32_1 = arith.constant 0 : i32
    return %c0_i32, %c0_i32_0 : i32, i32
  }
  func.func @transform_3(%arg0: i32) -> (i32, i32) {
    %c0_i32 = arith.constant 0 : i32
    %c0_i32_0 = arith.constant 0 : i32
    %c0_i32_1 = arith.constant 0 : i32
    return %c0_i32, %c0_i32_0 : i32, i32
  }
  func.func @transform_4(%arg0: i32) -> (i32, i32) {
    %c0_i32 = arith.constant 0 : i32
    %c0_i32_0 = arith.constant 0 : i32
    %c0_i32_1 = arith.constant 0 : i32
    return %c0_i32, %c0_i32_0 : i32, i32
  }
  func.func @transform_5(%arg0: i32) -> (i32, i32) {
    %c0_i32 = arith.constant 0 : i32
    %c0_i32_0 = arith.constant 0 : i32
    %c0_i32_1 = arith.constant 0 : i32
    return %c0_i32, %c0_i32_0 : i32, i32
  }
  func.func @transform_6(%arg0: i32) -> (i32, i32) {
    %c0_i32 = arith.constant 0 : i32
    %c0_i32_0 = arith.constant 0 : i32
    %c0_i32_1 = arith.constant 0 : i32
    return %c0_i32, %c0_i32_0 : i32, i32
  }
  func.func @transform_7(%arg0: i32) -> (i32, i32) {
    %c0_i32 = arith.constant 0 : i32
    %c0_i32_0 = arith.constant 0 : i32
    %c0_i32_1 = arith.constant 0 : i32
    return %c0_i32, %c0_i32_0 : i32, i32
  }
  func.func @transform_8(%arg0: i32) -> (i32, i32) {
    %c0_i32 = arith.constant 0 : i32
    %c0_i32_0 = arith.constant 0 : i32
    %c0_i32_1 = arith.constant 0 : i32
    return %c0_i32, %c0_i32_0 : i32, i32
  }
  func.func @transform_9(%arg0: i32) -> (i32, i32) {
    %c0_i32 = arith.constant 0 : i32
    %c0_i32_0 = arith.constant 0 : i32
    %c0_i32_1 = arith.constant 0 : i32
    return %c0_i32, %c0_i32_0 : i32, i32
  }
  func.func @transform_10(%arg0: i32) -> (i32, i32) {
    %c0_i32 = arith.constant 0 : i32
    %c0_i32_0 = arith.constant 0 : i32
    %c0_i32_1 = arith.constant 0 : i32
    return %c0_i32, %c0_i32_0 : i32, i32
  }
  func.func @transform_11(%arg0: i32) -> (i32, i32) {
    %c0_i32 = arith.constant 0 : i32
    %c0_i32_0 = arith.constant 0 : i32
    %c0_i32_1 = arith.constant 0 : i32
    return %c0_i32, %c0_i32_0 : i32, i32
  }
  func.func @transform_12(%arg0: i32) -> (i32, i32) {
    %c0_i32 = arith.constant 0 : i32
    %c0_i32_0 = arith.constant 0 : i32
    %c0_i32_1 = arith.constant 0 : i32
    return %c0_i32, %c0_i32_0 : i32, i32
  }
  func.func @transform_13(%arg0: i32) -> (i32, i32) {
    %c0_i32 = arith.constant 0 : i32
    %c0_i32_0 = arith.constant 0 : i32
    %c0_i32_1 = arith.constant 0 : i32
    return %c0_i32, %c0_i32_0 : i32, i32
  }
  func.func @transform_14(%arg0: i32) -> (i32, i32) {
    %c0_i32 = arith.constant 0 : i32
    %c0_i32_0 = arith.constant 0 : i32
    return %arg0, %c0_i32 : i32, i32
  }
}

</mosaic_0001>

<llo_original>
// kernel: tpu_custom_call.1
$region0: #{tpu_custom_call.1}
  #allocation0 [shape = 'u32[]', space=smem, size = 0x4, offset = 0x4, fixed_abs, tag = 'smem constant byte address 0x4 - core index']
  #allocation1 [shape = 'u32[144,128]{1,0:T(1,128)}', space=vmem, size = 0x12000, scoped, tag = 'internal scratch']
  %s0 = inlined_call_operand.vmem [shape: f32[16,4], index: 0, kind: input, shape index: {}]
  %s1 = inlined_call_operand.vmem [shape: f32[4,32], index: 1, kind: input, shape index: {}]
  %s2 = inlined_call_operand.vmem [shape: f32[1,32], index: 2, kind: input, shape index: {}]
  %s3 = inlined_call_operand.vmem [shape: f32[1,32], index: 3, kind: input, shape index: {}]
  %s4 = inlined_call_operand.hbm [shape: f32[1,32], index: 4, kind: input, shape index: {}]
  %s5 = inlined_call_operand.hbm [shape: f32[32,32], index: 5, kind: input, shape index: {}]
  %s6 = inlined_call_operand.hbm [shape: f32[4,32], index: 6, kind: input, shape index: {}]
  %s7 = inlined_call_operand.hbm [shape: f32[1,32], index: 7, kind: input, shape index: {}]
  %s8 = inlined_call_operand.hbm [shape: f32[1,32], index: 8, kind: input, shape index: {}]
  %s9 = inlined_call_operand.hbm [shape: f32[1,32], index: 9, kind: input, shape index: {}]
  %s10 = inlined_call_operand.vmem [shape: f32[32,32], index: 10, kind: input, shape index: {}]
  %s11 = inlined_call_operand.vmem [shape: f32[1,32], index: 11, kind: input, shape index: {}]
  %s12 = inlined_call_operand.hbm [shape: f32[32,128], index: 12, kind: input, shape index: {}]
  %s13 = inlined_call_operand.vmem [shape: f32[1,128], index: 13, kind: input, shape index: {}]
  %s14 = inlined_call_operand.hbm [shape: f32[16,128], index: 14, kind: output, shape index: {}]
  %s15 = sld [smem:[#allocation0]]
  $region94: #{tpu_custom_call.1} parent=0
    _
  %s17 = ssub.s32 1, %s15
  %s18 = scalar_select 0, %s17, %s15
  $region1: #{tpu_custom_call.1} parent=0
    #allocation2 [shape = 'u8[512]{0}', space=vmem, size = 0x400, scoped, tag = 'input window, operand 4, single buffered']
    #allocation3 [shape = 's32[1]{0}', space=sflag, size = 0x4, scoped, tag = 'scoped memory for tpu_custom_call.1']
    #allocation4 [shape = 's32[1]{0}', space=sflag, size = 0x4, scoped, tag = 'scoped memory for tpu_custom_call.1']
    #allocation5 [shape = 'u8[16384]{0}', space=vmem, size = 0x4000, scoped, tag = 'input window, operand 5, single buffered']
    #allocation6 [shape = 's32[1]{0}', space=sflag, size = 0x4, scoped, tag = 'scoped memory for tpu_custom_call.1']
    #allocation7 [shape = 'u8[2048]{0}', space=vmem, size = 0x800, scoped, tag = 'input window, operand 6, single buffered']
    #allocation8 [shape = 'u8[512]{0}', space=vmem, size = 0x400, scoped, tag = 'input window, operand 7, single buffered']
    #allocation9 [shape = 's32[1]{0}', space=sflag, size = 0x4, scoped, tag = 'scoped memory for tpu_custom_call.1']
    #allocation10 [shape = 'u8[512]{0}', space=vmem, size = 0x400, scoped, tag = 'input window, operand 8, single buffered']
    #allocation11 [shape = 'u8[512]{0}', space=vmem, size = 0x400, scoped, tag = 'input window, operand 9, single buffered']
    #allocation12 [shape = 's32[1]{0}', space=sflag, size = 0x4, scoped, tag = 'scoped memory for tpu_custom_call.1']
    #allocation13 [shape = 'u8[16384]{0}', space=vmem, size = 0x4000, scoped, tag = 'input window, operand 12, single buffered']
    #allocation14 [shape = 'u8[8192]{0}', space=vmem, size = 0x2000, scoped, tag = 'output window, operand 0, single buffered']
    %19 = vsyncpa [#allocation3], 0
    %20 = vsyncpa [#allocation6], 0
    %21 = vsyncpa [#allocation9], 0
    %22 = vsyncpa [#allocation12], 0
    %23 = vsyncpa [#allocation4], 0
    // Predicated region
    $region2: #{tpu_custom_call.1} parent=1 // pred_check
      _
    $region3: #{tpu_custom_call.1} parent=1 // pred_check_branch
      %25 = sbr.rel (0) target = $region5
    $region4: #{tpu_custom_call.1} parent=1 // pred_region
      _
    $region5: #{tpu_custom_call.1} parent=1 // pred_fallthru
      _
    // Predicated region
    $region6: #{tpu_custom_call.1} parent=1 // pred_check
      _
    $region7: #{tpu_custom_call.1} parent=1 // pred_check_branch
      %27 = sbr.rel (0) target = $region9
    $region8: #{tpu_custom_call.1} parent=1 // pred_region
      _
    $region9: #{tpu_custom_call.1} parent=1 // pred_fallthru
      _
    // Predicated region
    $region10: #{tpu_custom_call.1} parent=1 // pred_check
      _
    $region11: #{tpu_custom_call.1} parent=1 // pred_check_branch
      %29 = sbr.rel (0) target = $region13
    $region12: #{tpu_custom_call.1} parent=1 // pred_region
      _
    $region13: #{tpu_custom_call.1} parent=1 // pred_fallthru
      _
    // Predicated region
    $region14: #{tpu_custom_call.1} parent=1 // pred_check
      _
    $region15: #{tpu_custom_call.1} parent=1 // pred_check_branch
      %31 = sbr.rel (0) target = $region17
    $region16: #{tpu_custom_call.1} parent=1 // pred_region
      _
    $region17: #{tpu_custom_call.1} parent=1 // pred_fallthru
      _
    // Predicated region
    $region18: #{tpu_custom_call.1} parent=1 // pred_check
      _
    $region19: #{tpu_custom_call.1} parent=1 // pred_check_branch
      %33 = sbr.rel (0) target = $region21
    $region20: #{tpu_custom_call.1} parent=1 // pred_region
      %s35 = ssub.s32 16, 16
      %36 = vsyncadd [#allocation3], %s35
      %s38 = sshll.u32 [#allocation2], 4
      %s39 = int_to_ptr.vmem [resolvable:$true] %s38
      %41 = dma.hbm_to_vmem [thread:$0]  %s4, 16, %s39, [#allocation3]
    $region21: #{tpu_custom_call.1} parent=1 // pred_fallthru
      _
    // Predicated region
    $region22: #{tpu_custom_call.1} parent=1 // pred_check
      _
    $region23: #{tpu_custom_call.1} parent=1 // pred_check_branch
      %43 = sbr.rel (0) target = $region25
    $region24: #{tpu_custom_call.1} parent=1 // pred_region
      %s45 = ssub.s32 512, 512
      %46 = vsyncadd [#allocation6], %s45
      %s47 = sshll.u32 [#allocation5], 4
      %s48 = int_to_ptr.vmem [resolvable:$true] %s47
      %53 = dma.hbm_to_vmem [thread:$0]  %s5, 512, %s48, [#allocation6], 128, 128, 8
    $region25: #{tpu_custom_call.1} parent=1 // pred_fallthru
      _
    // Predicated region
    $region26: #{tpu_custom_call.1} parent=1 // pred_check
      _
    $region27: #{tpu_custom_call.1} parent=1 // pred_check_branch
      %55 = sbr.rel (0) target = $region29
    $region28: #{tpu_custom_call.1} parent=1 // pred_region
      %s57 = ssub.s32 64, 64
      %58 = vsyncadd [#allocation6], %s57
      %s60 = sshll.u32 [#allocation7], 4
      %s61 = int_to_ptr.vmem [resolvable:$true] %s60
      %63 = dma.hbm_to_vmem [thread:$0]  %s6, 64, %s61, [#allocation6]
    $region29: #{tpu_custom_call.1} parent=1 // pred_fallthru
      _
    // Predicated region
    $region30: #{tpu_custom_call.1} parent=1 // pred_check
      _
    $region31: #{tpu_custom_call.1} parent=1 // pred_check_branch
      %65 = sbr.rel (0) target = $region33
    $region32: #{tpu_custom_call.1} parent=1 // pred_region
      %s67 = ssub.s32 16, 16
      %68 = vsyncadd [#allocation9], %s67
      %s70 = sshll.u32 [#allocation8], 4
      %s71 = int_to_ptr.vmem [resolvable:$true] %s70
      %73 = dma.hbm_to_vmem [thread:$0]  %s7, 16, %s71, [#allocation9]
    $region33: #{tpu_custom_call.1} parent=1 // pred_fallthru
      _
    // Predicated region
    $region34: #{tpu_custom_call.1} parent=1 // pred_check
      _
    $region35: #{tpu_custom_call.1} parent=1 // pred_check_branch
      %75 = sbr.rel (0) target = $region37
    $region36: #{tpu_custom_call.1} parent=1 // pred_region
      %s77 = ssub.s32 16, 16
      %78 = vsyncadd [#allocation9], %s77
      %s80 = sshll.u32 [#allocation10], 4
      %s81 = int_to_ptr.vmem [resolvable:$true] %s80
      %83 = dma.hbm_to_vmem [thread:$0]  %s8, 16, %s81, [#allocation9]
    $region37: #{tpu_custom_call.1} parent=1 // pred_fallthru
      _
    // Predicated region
    $region38: #{tpu_custom_call.1} parent=1 // pred_check
      _
    $region39: #{tpu_custom_call.1} parent=1 // pred_check_branch
      %85 = sbr.rel (0) target = $region41
    $region40: #{tpu_custom_call.1} parent=1 // pred_region
      %s87 = ssub.s32 16, 16
      %88 = vsyncadd [#allocation12], %s87
      %s90 = sshll.u32 [#allocation11], 4
      %s91 = int_to_ptr.vmem [resolvable:$true] %s90
      %93 = dma.hbm_to_vmem [thread:$0]  %s9, 16, %s91, [#allocation12]
    $region41: #{tpu_custom_call.1} parent=1 // pred_fallthru
      _
    // Predicated region
    $region42: #{tpu_custom_call.1} parent=1 // pred_check
      _
    $region43: #{tpu_custom_call.1} parent=1 // pred_check_branch
      %95 = sbr.rel (0) target = $region45
    $region44: #{tpu_custom_call.1} parent=1 // pred_region
      _
    $region45: #{tpu_custom_call.1} parent=1 // pred_fallthru
      _
    // Predicated region
    $region46: #{tpu_custom_call.1} parent=1 // pred_check
      _
    $region47: #{tpu_custom_call.1} parent=1 // pred_check_branch
      %97 = sbr.rel (0) target = $region49
    $region48: #{tpu_custom_call.1} parent=1 // pred_region
      _
    $region49: #{tpu_custom_call.1} parent=1 // pred_fallthru
      _
    // Predicated region
    $region50: #{tpu_custom_call.1} parent=1 // pred_check
      _
    $region51: #{tpu_custom_call.1} parent=1 // pred_check_branch
      %99 = sbr.rel (0) target = $region53
    $region52: #{tpu_custom_call.1} parent=1 // pred_region
      %s101 = ssub.s32 512, 512
      %102 = vsyncadd [#allocation12], %s101
      %s103 = sshll.u32 [#allocation13], 4
      %s104 = int_to_ptr.vmem [resolvable:$true] %s103
      %109 = dma.hbm_to_vmem [thread:$0]  %s12, 512, %s104, [#allocation12], 128, 128, 8
    $region53: #{tpu_custom_call.1} parent=1 // pred_fallthru
      _
    // Predicated region
    $region54: #{tpu_custom_call.1} parent=1 // pred_check
      _
    $region55: #{tpu_custom_call.1} parent=1 // pred_check_branch
      %111 = sbr.rel (0) target = $region57
    $region56: #{tpu_custom_call.1} parent=1 // pred_region
      _
    $region57: #{tpu_custom_call.1} parent=1 // pred_fallthru
      _
    // Predicated region
    $region58: #{tpu_custom_call.1} parent=1 // pred_check
      _
    $region59: #{tpu_custom_call.1} parent=1 // pred_check_branch
      %113 = sbr.rel (0) target = $region61
    $region60: #{tpu_custom_call.1} parent=1 // pred_region
      %114 = dma.done [#allocation3], 16
    $region61: #{tpu_custom_call.1} parent=1 // pred_fallthru
      _
    // Predicated region
    $region62: #{tpu_custom_call.1} parent=1 // pred_check
      _
    $region63: #{tpu_custom_call.1} parent=1 // pred_check_branch
      %116 = sbr.rel (0) target = $region65
    $region64: #{tpu_custom_call.1} parent=1 // pred_region
      %117 = dma.done [#allocation6], 512
    $region65: #{tpu_custom_call.1} parent=1 // pred_fallthru
      _
    // Predicated region
    $region66: #{tpu_custom_call.1} parent=1 // pred_check
      _
    $region67: #{tpu_custom_call.1} parent=1 // pred_check_branch
      %119 = sbr.rel (0) target = $region69
    $region68: #{tpu_custom_call.1} parent=1 // pred_region
      %120 = dma.done [#allocation6], 64
    $region69: #{tpu_custom_call.1} parent=1 // pred_fallthru
      _
    // Predicated region
    $region70: #{tpu_custom_call.1} parent=1 // pred_check
      _
    $region71: #{tpu_custom_call.1} parent=1 // pred_check_branch
      %122 = sbr.rel (0) target = $region73
    $region72: #{tpu_custom_call.1} parent=1 // pred_region
      %123 = dma.done [#allocation9], 16
    $region73: #{tpu_custom_call.1} parent=1 // pred_fallthru
      _
    // Predicated region
    $region74: #{tpu_custom_call.1} parent=1 // pred_check
      _
    $region75: #{tpu_custom_call.1} parent=1 // pred_check_branch
      %125 = sbr.rel (0) target = $region77
    $region76: #{tpu_custom_call.1} parent=1 // pred_region
      %126 = dma.done [#allocation9], 16
    $region77: #{tpu_custom_call.1} parent=1 // pred_fallthru
      _
    // Predicated region
    $region78: #{tpu_custom_call.1} parent=1 // pred_check
      _
    $region79: #{tpu_custom_call.1} parent=1 // pred_check_branch
      %128 = sbr.rel (0) target = $region81
    $region80: #{tpu_custom_call.1} parent=1 // pred_region
      %129 = dma.done [#allocation12], 16
    $region81: #{tpu_custom_call.1} parent=1 // pred_fallthru
      _
    // Predicated region
    $region82: #{tpu_custom_call.1} parent=1 // pred_check
      _
    $region83: #{tpu_custom_call.1} parent=1 // pred_check_branch
      %131 = sbr.rel (0) target = $region85
    $region84: #{tpu_custom_call.1} parent=1 // pred_region
      %132 = dma.done [#allocation12], 512
    $region85: #{tpu_custom_call.1} parent=1 // pred_fallthru
      _
    %v133 = vld [vmem:[%s0] sm:$0xff]
    %v134 = vld [vmem:[%s0 + $0x8] sm:$0xff]
    %v135 = vld [vmem:[%s1] sm:$0xf]
    %137 = vset.pattern.permute.xlu0 0
    %138 = vperm.xlu0 %137, %v133
    %v139 = vpop.permute.xlu0 %138
    %142 = vset.pattern.permute.xlu0 0
    %143 = vperm.xlu0 %142, %v134
    %v144 = vpop.permute.xlu0 %143
    %v146 = vlaneseq
    %v147 = vshrl.u32 %v146, 7
    %v148 = vsub.s32 0, %v147
    %v149 = vrot.slane %v135, %v148
    %v150 = vmul.f32 %v139, %v149
    %v151 = vmul.f32 %v144, %v149
    %152 = vset.pattern.permute.xlu0 1
    %153 = vperm.xlu0 %152, %v133
    %v154 = vpop.permute.xlu0 %153
    %156 = vset.pattern.permute.xlu0 1
    %157 = vperm.xlu0 %156, %v134
    %v158 = vpop.permute.xlu0 %157
    %v160 = vlaneseq
    %v161 = vshrl.u32 %v160, 7
    %v162 = vsub.s32 1, %v161
    %v163 = vrot.slane %v135, %v162
    %v164 = vmul.f32 %v154, %v163
    %v165 = vmul.f32 %v158, %v163
    %v166 = vadd.f32 %v150, %v164
    %v167 = vadd.f32 %v151, %v165
    %168 = vset.pattern.permute.xlu0 2
    %169 = vperm.xlu0 %168, %v133
    %v170 = vpop.permute.xlu0 %169
    %172 = vset.pattern.permute.xlu0 2
    %173 = vperm.xlu0 %172, %v134
    %v174 = vpop.permute.xlu0 %173
    %v176 = vlaneseq
    %v177 = vshrl.u32 %v176, 7
    %v178 = vsub.s32 2, %v177
    %v179 = vrot.slane %v135, %v178
    %v180 = vmul.f32 %v170, %v179
    %v181 = vmul.f32 %v174, %v179
    %v182 = vadd.f32 %v166, %v180
    %v183 = vadd.f32 %v167, %v181
    %184 = vset.pattern.permute.xlu0 3
    %185 = vperm.xlu0 %184, %v133
    %v186 = vpop.permute.xlu0 %185
    %188 = vset.pattern.permute.xlu0 3
    %189 = vperm.xlu0 %188, %v134
    %v190 = vpop.permute.xlu0 %189
    %v192 = vlaneseq
    %v193 = vshrl.u32 %v192, 7
    %v194 = vsub.s32 3, %v193
    %v195 = vrot.slane %v135, %v194
    %v196 = vmul.f32 %v186, %v195
    %v197 = vmul.f32 %v190, %v195
    %v198 = vadd.f32 %v182, %v196
    %v199 = vadd.f32 %v183, %v197
    %v200 = vld [vmem:[%s2] sm:$0x1]
    %v202 = vlaneseq
    %v203 = vshrl.u32 %v202, 7
    %v204 = vsub.s32 0, %v203
    %v205 = vrot.slane %v200, %v204
    %v207 = vadd.f32 %v198, %v205
    %v208 = vadd.f32 %v199, %v205
    %v209 = vld [vmem:[%s3] sm:$0x1]
    %v210 = vld [vmem:[#allocation2] sm:$0x1]
    %vm211 = vcmask 261120
    %v212 = vsel %vm211, %v207, 0.0
    %213 = vadd.xlane.f32.xlu0 %v212
    %v214 = vpop.xlane.xlu0 %213
    %v215 = vsel %vm211, %v208, 0.0
    %216 = vadd.xlane.f32.xlu0 %v215
    %v217 = vpop.xlane.xlu0 %216
    %v218 = vmul.f32 %v207, %v207
    %v219 = vmul.f32 %v208, %v208
    %v220 = vsel %vm211, %v218, 0.0
    %221 = vadd.xlane.f32.xlu0 %v220
    %v222 = vpop.xlane.xlu0 %221
    %v223 = vsel %vm211, %v219, 0.0
    %224 = vadd.xlane.f32.xlu0 %v223
    %v225 = vpop.xlane.xlu0 %224
    %v226 = vmul.f32 %v214, 0.03125
    %v227 = vmul.f32 %v217, 0.03125
    %v228 = vmul.f32 %v222, 0.03125
    %v229 = vmul.f32 %v225, 0.03125
    %v230 = vmul.f32 %v226, %v226
    %v231 = vmul.f32 %v227, %v227
    %v232 = vsub.f32 %v228, %v230
    %v233 = vsub.f32 %v229, %v231
    %v234 = vsub.f32 %v207, %v226
    %v235 = vsub.f32 %v208, %v227
    %v236 = vadd.f32 %v232, 1e-05
    %v237 = vadd.f32 %v233, 1e-05
    %v238 = vrsqrt.pop %v236
    %v239 = vrsqrt.pop %v237
    %v240 = vmul.f32 %v234, %v238
    %v241 = vmul.f32 %v235, %v239
    %v243 = vlaneseq
    %v244 = vshrl.u32 %v243, 7
    %v245 = vsub.s32 0, %v244
    %v246 = vrot.slane %v209, %v245
    %v248 = vmul.f32 %v240, %v246
    %v249 = vmul.f32 %v241, %v246
    %v251 = vlaneseq
    %v252 = vshrl.u32 %v251, 7
    %v253 = vsub.s32 0, %v252
    %v254 = vrot.slane %v210, %v253
    %v256 = vadd.f32 %v248, %v254
    %v257 = vadd.f32 %v249, %v254
    %v258 = vmax.f32 %v256, 0.0
    %v259 = vmax.f32 %v257, 0.0
    %v260 = vld [vmem:[#allocation5] sm:$0xff]
    %v261 = vld [vmem:[#allocation5 + $0x8] sm:$0xff]
    %v262 = vld [vmem:[#allocation5 + $0x10] sm:$0xff]
    %v263 = vld [vmem:[#allocation5 + $0x18] sm:$0xff]
    %v264 = vld [vmem:[#allocation7] sm:$0xf]
    %v265 = vlaneseq
    %v266 = vshrl.u32 %v265, 7
    %v267 = vsub.s32 0, %v266
    %v268 = vrot.slane %v264, %v267
    %v269 = vmul.f32 %v139, %v268
    %v270 = vmul.f32 %v144, %v268
    %v271 = vlaneseq
    %v272 = vshrl.u32 %v271, 7
    %v273 = vsub.s32 1, %v272
    %v274 = vrot.slane %v264, %v273
    %v275 = vmul.f32 %v154, %v274
    %v276 = vmul.f32 %v158, %v274
    %v277 = vadd.f32 %v269, %v275
    %v278 = vadd.f32 %v270, %v276
    %v279 = vlaneseq
    %v280 = vshrl.u32 %v279, 7
    %v281 = vsub.s32 2, %v280
    %v282 = vrot.slane %v264, %v281
    %v283 = vmul.f32 %v170, %v282
    %v284 = vmul.f32 %v174, %v282
    %v285 = vadd.f32 %v277, %v283
    %v286 = vadd.f32 %v278, %v284
    %v287 = vlaneseq
    %v288 = vshrl.u32 %v287, 7
    %v289 = vsub.s32 3, %v288
    %v290 = vrot.slane %v264, %v289
    %v291 = vmul.f32 %v186, %v290
    %v292 = vmul.f32 %v190, %v290
    %v293 = vadd.f32 %v285, %v291
    %v294 = vadd.f32 %v286, %v292
    %v296 = vsel %vm211, %v258, 0
    %v299 = vsel %vm211, %v259, 0
    %301 = vmatprep.subr.mxu0 0.0
    %302 = vmatpush1.msra.mxu0 0.0
    %303 = vmatprep.subr.mxu0 0.0
    %304 = vmatpush1.msra.mxu0 0.0
    %305 = vmatprep.subr.mxu0 0.0
    %306 = vmatpush1.msra.mxu0 0.0
    %307 = vmatprep.subr.mxu0 0.0
    %308 = vmatpush1.msra.mxu0 0.0
    %309 = vmatprep.subr.mxu0 0.0
    %310 = vmatpush1.msra.mxu0 0.0
    %311 = vmatprep.subr.mxu0 0.0
    %312 = vmatpush1.msra.mxu0 0.0
    %313 = vmatprep.subr.mxu0 0.0
    %314 = vmatpush1.msra.mxu0 0.0
    %315 = vmatprep.subr.mxu0 0.0
    %316 = vmatpush1.msra.mxu0 0.0
    %317 = vmatprep.subr.mxu0 0.0
    %318 = vmatpush1.msra.mxu0 0.0
    %319 = vmatprep.subr.mxu0 0.0
    %320 = vmatpush1.msra.mxu0 0.0
    %321 = vmatprep.subr.mxu0 0.0
    %322 = vmatpush1.msra.mxu0 0.0
    %323 = vmatprep.subr.mxu0 0.0
    %324 = vmatpush1.msra.mxu0 0.0
    %325 = vmatprep.subr.mxu0 0.0
    %326 = vmatpush1.msra.mxu0 %v263
    %327 = vmatprep.subr.mxu0 0.0
    %328 = vmatpush1.msra.mxu0 %v262
    %329 = vmatprep.subr.mxu0 0.0
    %330 = vmatpush1.msra.mxu0 %v261
    %331 = vmatprep.subr.mxu0 0.0
    %332 = vmatpush1.msra.mxu0 %v260
    %333 = vmatprep.subr.mxu0 0.0
    %334 = vmatpush2.msra.mxu0 0.0
    %335 = vmatprep.subr.mxu0 0.0
    %336 = vmatpush2.msra.mxu0 0.0
    %337 = vmatprep.subr.mxu0 0.0
    %338 = vmatpush2.msra.mxu0 0.0
    %339 = vmatprep.subr.mxu0 0.0
    %340 = vmatpush2.msra.mxu0 0.0
    %341 = vmatprep.subr.mxu0 0.0
    %342 = vmatpush2.msra.mxu0 0.0
    %343 = vmatprep.subr.mxu0 0.0
    %344 = vmatpush2.msra.mxu0 0.0
    %345 = vmatprep.subr.mxu0 0.0
    %346 = vmatpush2.msra.mxu0 0.0
    %347 = vmatprep.subr.mxu0 0.0
    %348 = vmatpush2.msra.mxu0 0.0
    %349 = vmatprep.subr.mxu0 0.0
    %350 = vmatpush2.msra.mxu0 0.0
    %351 = vmatprep.subr.mxu0 0.0
    %352 = vmatpush2.msra.mxu0 0.0
    %353 = vmatprep.subr.mxu0 0.0
    %354 = vmatpush2.msra.mxu0 0.0
    %355 = vmatprep.subr.mxu0 0.0
    %356 = vmatpush2.msra.mxu0 0.0
    %357 = vmatprep.subr.mxu0 0.0
    %358 = vmatpush2.msra.mxu0 0.0
    %359 = vmatprep.subr.mxu0 0.0
    %360 = vmatpush2.msra.mxu0 0.0
    %361 = vmatprep.subr.mxu0 0.0
    %362 = vmatpush2.msra.mxu0 0.0
    %363 = vmatprep.subr.mxu0 0.0
    %364 = vmatpush2.msra.mxu0 0.0
    %365 = vmatprep.mubr.f32.mxu0 0.0
    %366 = vmatmul.mubr.f32.gmra.mxu0 %v296
    %v367 = vpop.f32.mrf.mxu0
    %v368 = vadd.f32 %v293, %v367
    %v369 = vpop.f32.mrf.mxu0
    %370 = vmatprep.mubr.f32.mxu0 0.0
    %371 = vmatmul.mubr.f32.gmra.mxu0 %v299
    %v372 = vpop.f32.mrf.mxu0
    %v373 = vadd.f32 %v294, %v372
    %v374 = vpop.f32.mrf.mxu0
    %375 = vdwg.mxu0
    %v376 = vld [vmem:[#allocation8] sm:$0x1]
    %v378 = vlaneseq
    %v379 = vshrl.u32 %v378, 7
    %v380 = vsub.s32 0, %v379
    %v381 = vrot.slane %v376, %v380
    %v383 = vadd.f32 %v368, %v381
    %v384 = vadd.f32 %v373, %v381
    %v385 = vld [vmem:[#allocation10] sm:$0x1]
    %v386 = vld [vmem:[#allocation11] sm:$0x1]
    %v387 = vsel %vm211, %v383, 0.0
    %388 = vadd.xlane.f32.xlu0 %v387
    %v389 = vpop.xlane.xlu0 %388
    %v390 = vsel %vm211, %v384, 0.0
    %391 = vadd.xlane.f32.xlu0 %v390
    %v392 = vpop.xlane.xlu0 %391
    %v393 = vmul.f32 %v383, %v383
    %v394 = vmul.f32 %v384, %v384
    %v395 = vsel %vm211, %v393, 0.0
    %396 = vadd.xlane.f32.xlu0 %v395
    %v397 = vpop.xlane.xlu0 %396
    %v398 = vsel %vm211, %v394, 0.0
    %399 = vadd.xlane.f32.xlu0 %v398
    %v400 = vpop.xlane.xlu0 %399
    %v401 = vmul.f32 %v389, 0.03125
    %v402 = vmul.f32 %v392, 0.03125
    %v403 = vmul.f32 %v397, 0.03125
    %v404 = vmul.f32 %v400, 0.03125
    %v405 = vmul.f32 %v401, %v401
    %v406 = vmul.f32 %v402, %v402
    %v407 = vsub.f32 %v403, %v405
    %v408 = vsub.f32 %v404, %v406
    %v409 = vsub.f32 %v383, %v401
    %v410 = vsub.f32 %v384, %v402
    %v411 = vadd.f32 %v407, 1e-05
    %v412 = vadd.f32 %v408, 1e-05
    %v413 = vrsqrt.pop %v411
    %v414 = vrsqrt.pop %v412
    %v415 = vmul.f32 %v409, %v413
    %v416 = vmul.f32 %v410, %v414
    %v418 = vlaneseq
    %v419 = vshrl.u32 %v418, 7
    %v420 = vsub.s32 0, %v419
    %v421 = vrot.slane %v385, %v420
    %v423 = vmul.f32 %v415, %v421
    %v424 = vmul.f32 %v416, %v421
    %v426 = vlaneseq
    %v427 = vshrl.u32 %v426, 7
    %v428 = vsub.s32 0, %v427
    %v429 = vrot.slane %v386, %v428
    %v431 = vadd.f32 %v423, %v429
    %v432 = vadd.f32 %v424, %v429
    %v433 = vmax.f32 %v431, 0.0
    %v434 = vmax.f32 %v432, 0.0
    %v435 = vld [vmem:[%s10] sm:$0xff]
    %v436 = vld [vmem:[%s10 + $0x8] sm:$0xff]
    %v437 = vld [vmem:[%s10 + $0x10] sm:$0xff]
    %v438 = vld [vmem:[%s10 + $0x18] sm:$0xff]
    %v439 = vld [vmem:[%s11] sm:$0x1]
    %v441 = vlaneseq
    %v442 = vshrl.u32 %v441, 7
    %v443 = vsub.s32 0, %v442
    %v444 = vrot.slane %v439, %v443
    %v447 = vsel %vm211, %v433, 0
    %v450 = vsel %vm211, %v434, 0
    %452 = vmatprep.subr.mxu0 0.0
    %453 = vmatpush1.msra.mxu0 0.0
    %454 = vmatprep.subr.mxu0 0.0
    %455 = vmatpush1.msra.mxu0 0.0
    %456 = vmatprep.subr.mxu0 0.0
    %457 = vmatpush1.msra.mxu0 0.0
    %458 = vmatprep.subr.mxu0 0.0
    %459 = vmatpush1.msra.mxu0 0.0
    %460 = vmatprep.subr.mxu0 0.0
    %461 = vmatpush1.msra.mxu0 0.0
    %462 = vmatprep.subr.mxu0 0.0
    %463 = vmatpush1.msra.mxu0 0.0
    %464 = vmatprep.subr.mxu0 0.0
    %465 = vmatpush1.msra.mxu0 0.0
    %466 = vmatprep.subr.mxu0 0.0
    %467 = vmatpush1.msra.mxu0 0.0
    %468 = vmatprep.subr.mxu0 0.0
    %469 = vmatpush1.msra.mxu0 0.0
    %470 = vmatprep.subr.mxu0 0.0
    %471 = vmatpush1.msra.mxu0 0.0
    %472 = vmatprep.subr.mxu0 0.0
    %473 = vmatpush1.msra.mxu0 0.0
    %474 = vmatprep.subr.mxu0 0.0
    %475 = vmatpush1.msra.mxu0 0.0
    %476 = vmatprep.subr.mxu0 0.0
    %477 = vmatpush1.msra.mxu0 %v438
    %478 = vmatprep.subr.mxu0 0.0
    %479 = vmatpush1.msra.mxu0 %v437
    %480 = vmatprep.subr.mxu0 0.0
    %481 = vmatpush1.msra.mxu0 %v436
    %482 = vmatprep.subr.mxu0 0.0
    %483 = vmatpush1.msra.mxu0 %v435
    %484 = vmatprep.subr.mxu0 0.0
    %485 = vmatpush2.msra.mxu0 0.0
    %486 = vmatprep.subr.mxu0 0.0
    %487 = vmatpush2.msra.mxu0 0.0
    %488 = vmatprep.subr.mxu0 0.0
    %489 = vmatpush2.msra.mxu0 0.0
    %490 = vmatprep.subr.mxu0 0.0
    %491 = vmatpush2.msra.mxu0 0.0
    %492 = vmatprep.subr.mxu0 0.0
    %493 = vmatpush2.msra.mxu0 0.0
    %494 = vmatprep.subr.mxu0 0.0
    %495 = vmatpush2.msra.mxu0 0.0
    %496 = vmatprep.subr.mxu0 0.0
    %497 = vmatpush2.msra.mxu0 0.0
    %498 = vmatprep.subr.mxu0 0.0
    %499 = vmatpush2.msra.mxu0 0.0
    %500 = vmatprep.subr.mxu0 0.0
    %501 = vmatpush2.msra.mxu0 0.0
    %502 = vmatprep.subr.mxu0 0.0
    %503 = vmatpush2.msra.mxu0 0.0
    %504 = vmatprep.subr.mxu0 0.0
    %505 = vmatpush2.msra.mxu0 0.0
    %506 = vmatprep.subr.mxu0 0.0
    %507 = vmatpush2.msra.mxu0 0.0
    %508 = vmatprep.subr.mxu0 0.0
    %509 = vmatpush2.msra.mxu0 0.0
    %510 = vmatprep.subr.mxu0 0.0
    %511 = vmatpush2.msra.mxu0 0.0
    %512 = vmatprep.subr.mxu0 0.0
    %513 = vmatpush2.msra.mxu0 0.0
    %514 = vmatprep.subr.mxu0 0.0
    %515 = vmatpush2.msra.mxu0 0.0
    %516 = vmatprep.mubr.f32.mxu0 0.0
    %517 = vmatmul.mubr.f32.gmra.mxu0 %v447
    %v518 = vpop.f32.mrf.mxu0
    %v519 = vadd.f32 %v444, %v518
    %v520 = vpop.f32.mrf.mxu0
    %521 = vmatprep.mubr.f32.mxu0 0.0
    %522 = vmatmul.mubr.f32.gmra.mxu0 %v450
    %v523 = vpop.f32.mrf.mxu0
    %v524 = vadd.f32 %v444, %v523
    %v525 = vpop.f32.mrf.mxu0
    %526 = vdwg.mxu0
    %v527 = vadd.f32 %v519, %v433
    %v528 = vadd.f32 %v524, %v434
    %v529 = vmax.f32 %v527, 0.0
    %v530 = vmax.f32 %v528, 0.0
    %v531 = vld [vmem:[#allocation13] sm:$0xff]
    %v532 = vld [vmem:[#allocation13 + $0x8] sm:$0xff]
    %v533 = vld [vmem:[#allocation13 + $0x10] sm:$0xff]
    %v534 = vld [vmem:[#allocation13 + $0x18] sm:$0xff]
    %v535 = vld [vmem:[%s13] sm:$0x1]
    %v537 = vlaneseq
    %v538 = vshrl.u32 %v537, 7
    %v539 = vsub.s32 0, %v538
    %v540 = vrot.slane %v535, %v539
    %v543 = vsel %vm211, %v529, 0
    %v546 = vsel %vm211, %v530, 0
    %548 = vmatprep.subr.mxu0 0.0
    %549 = vmatpush1.msra.mxu0 0.0
    %550 = vmatprep.subr.mxu0 0.0
    %551 = vmatpush1.msra.mxu0 0.0
    %552 = vmatprep.subr.mxu0 0.0
    %553 = vmatpush1.msra.mxu0 0.0
    %554 = vmatprep.subr.mxu0 0.0
    %555 = vmatpush1.msra.mxu0 0.0
    %556 = vmatprep.subr.mxu0 0.0
    %557 = vmatpush1.msra.mxu0 0.0
    %558 = vmatprep.subr.mxu0 0.0
    %559 = vmatpush1.msra.mxu0 0.0
    %560 = vmatprep.subr.mxu0 0.0
    %561 = vmatpush1.msra.mxu0 0.0
    %562 = vmatprep.subr.mxu0 0.0
    %563 = vmatpush1.msra.mxu0 0.0
    %564 = vmatprep.subr.mxu0 0.0
    %565 = vmatpush1.msra.mxu0 0.0
    %566 = vmatprep.subr.mxu0 0.0
    %567 = vmatpush1.msra.mxu0 0.0
    %568 = vmatprep.subr.mxu0 0.0
    %569 = vmatpush1.msra.mxu0 0.0
    %570 = vmatprep.subr.mxu0 0.0
    %571 = vmatpush1.msra.mxu0 0.0
    %572 = vmatprep.subr.mxu0 0.0
    %573 = vmatpush1.msra.mxu0 %v534
    %574 = vmatprep.subr.mxu0 0.0
    %575 = vmatpush1.msra.mxu0 %v533
    %576 = vmatprep.subr.mxu0 0.0
    %577 = vmatpush1.msra.mxu0 %v532
    %578 = vmatprep.subr.mxu0 0.0
    %579 = vmatpush1.msra.mxu0 %v531
    %580 = vmatprep.subr.mxu0 0.0
    %581 = vmatpush2.msra.mxu0 0.0
    %582 = vmatprep.subr.mxu0 0.0
    %583 = vmatpush2.msra.mxu0 0.0
    %584 = vmatprep.subr.mxu0 0.0
    %585 = vmatpush2.msra.mxu0 0.0
    %586 = vmatprep.subr.mxu0 0.0
    %587 = vmatpush2.msra.mxu0 0.0
    %588 = vmatprep.subr.mxu0 0.0
    %589 = vmatpush2.msra.mxu0 0.0
    %590 = vmatprep.subr.mxu0 0.0
    %591 = vmatpush2.msra.mxu0 0.0
    %592 = vmatprep.subr.mxu0 0.0
    %593 = vmatpush2.msra.mxu0 0.0
    %594 = vmatprep.subr.mxu0 0.0
    %595 = vmatpush2.msra.mxu0 0.0
    %596 = vmatprep.subr.mxu0 0.0
    %597 = vmatpush2.msra.mxu0 0.0
    %598 = vmatprep.subr.mxu0 0.0
    %599 = vmatpush2.msra.mxu0 0.0
    %600 = vmatprep.subr.mxu0 0.0
    %601 = vmatpush2.msra.mxu0 0.0
    %602 = vmatprep.subr.mxu0 0.0
    %603 = vmatpush2.msra.mxu0 0.0
    %604 = vmatprep.subr.mxu0 0.0
    %605 = vmatpush2.msra.mxu0 0.0
    %606 = vmatprep.subr.mxu0 0.0
    %607 = vmatpush2.msra.mxu0 0.0
    %608 = vmatprep.subr.mxu0 0.0
    %609 = vmatpush2.msra.mxu0 0.0
    %610 = vmatprep.subr.mxu0 0.0
    %611 = vmatpush2.msra.mxu0 0.0
    %612 = vmatprep.mubr.f32.mxu0 0.0
    %613 = vmatmul.mubr.f32.gmra.mxu0 %v543
    %v614 = vpop.f32.mrf.mxu0
    %v615 = vadd.f32 %v540, %v614
    %v616 = vpop.f32.mrf.mxu0
    %617 = vmatprep.mubr.f32.mxu0 0.0
    %618 = vmatmul.mubr.f32.gmra.mxu0 %v546
    %v619 = vpop.f32.mrf.mxu0
    %v620 = vadd.f32 %v540, %v619
    %v621 = vpop.f32.mrf.mxu0
    %622 = vdwg.mxu0
    %623 = vst [vmem:[#allocation14] sm:$0xff] %v615
    %624 = vst [vmem:[#allocation14 + $0x8] sm:$0xff] %v620
    // Predicated region
    $region86: #{tpu_custom_call.1} parent=1 // pred_check
      _
    $region87: #{tpu_custom_call.1} parent=1 // pred_check_branch
      %626 = sbr.rel (0) target = $region89
    $region88: #{tpu_custom_call.1} parent=1 // pred_region
      %s628 = ssub.s32 256, 256
      %629 = vsyncadd [#allocation4], %s628
      %s630 = sshll.u32 [#allocation14], 4
      %s631 = int_to_ptr.vmem [resolvable:$true] %s630
      %636 = dma.vmem_to_hbm [thread:$0]  %s631, 256, %s14, [#allocation4], 128, 128, 8
    $region89: #{tpu_custom_call.1} parent=1 // pred_fallthru
      _
    // Predicated region
    $region90: #{tpu_custom_call.1} parent=1 // pred_check
      _
    $region91: #{tpu_custom_call.1} parent=1 // pred_check_branch
      %638 = sbr.rel (0) target = $region93
    $region92: #{tpu_custom_call.1} parent=1 // pred_region
      %639 = dma.done [#allocation4], 256
    $region93: #{tpu_custom_call.1} parent=1 // pred_fallthru
      _
    %640 = vsyncpa [#allocation3], 1
    %641 = vsyncpa [#allocation6], 1
    %642 = vsyncpa [#allocation9], 1
    %643 = vsyncpa [#allocation12], 1
    %644 = vsyncpa [#allocation4], 1

</llo_original>
